<compile_context>
chip_gen: v6e
topology: v6e:2x2x1
jax: 0.10.0
libtpu: 0.0.40
codegen_flags: <defaults>
</compile_context>

<pallas_src>
import jax
import jax.numpy as jnp
from jax.experimental import pallas as pl
from jax.experimental.pallas import tpu as pltpu

LANE = 128      # lane width  (last dim)
SUBLANE = 8     # sublane width (second-to-last dim)


def _round_up(n, m):
    return ((n + m - 1) // m) * m


def _cdiv(a, b):
    return (a + b - 1) // b


def _activation_fn(name):
    if name == "relu":
        return lambda x: jnp.maximum(x, 0.0)
    if name == "sigmoid":
        return jax.nn.sigmoid
    if name == "tanh":
        return jnp.tanh
    if name == "softplus":
        return jax.nn.softplus
    raise ValueError(f"Unknown activation: {name}")


# ----------------------------------------------------------------------------
# Pallas kernel: a plain MLP over one batch tile.  Normalization is already
# folded into the first layer's weights, so every layer is uniform.
# ----------------------------------------------------------------------------
def _make_ffnn_kernel(n_layers, activation):
    act = _activation_fn(activation)

    def kernel(*refs):
        # refs = (x, W1', b1', W2, b2, ..., Wout, bout, out)
        x_ref, out_ref = refs[0], refs[-1]
        w_refs = refs[1:-1]

        h = x_ref[...]                              # [tb, nin]  (unpadded K)
        for i in range(n_layers + 1):
            w = w_refs[2 * i][...]                  # [in(_p), out_p]
            b = w_refs[2 * i + 1][...]              # [1, out_p]  (f32)
            # trace-time conditional cast (no-op for f32 params):
            h_in = h if h.dtype == w.dtype else h.astype(w.dtype)
            # MXU matmul, always f32 accumulation.
            z = jnp.dot(h_in, w, preferred_element_type=jnp.float32)
            # bias-add & activation stay f32 (v5e has no bf16 VPU/EUP path).
            z = z + (b if b.dtype == jnp.float32 else b.astype(jnp.float32))
            h = act(z) if i < n_layers else z       # no activation on out layer
        out_ref[...] = h.astype(out_ref.dtype)

    return kernel


# ----------------------------------------------------------------------------
# Batch-tile derivation: >=2 (even) grid steps for v7x's two TensorCores,
# tiles capped at `max_tile_rows`, minimal batch over-padding.
# ----------------------------------------------------------------------------
def _choose_batch_tile(B, block_batch, max_tile_rows):
    b8 = _round_up(B, SUBLANE)
    if block_batch is not None:
        return min(_round_up(block_batch, SUBLANE), b8)
    steps = max(2, _cdiv(b8, max_tile_rows))
    if steps % 2:                      # even step count -> both v7x TCs busy
        steps += 1
    tb = _round_up(_cdiv(b8, steps), SUBLANE)
    return min(tb, b8)


# ----------------------------------------------------------------------------
# Wrapper: fold normalization, pad feature dims lane-dense, tile batch, call.
# ----------------------------------------------------------------------------
def ffnn_pallas(x, xmean, xstd, weights, biases, *, activation="tanh",
                block_batch=None, max_tile_rows=1024, param_dtype=None,
                return_padded=False, vmem_limit_bytes=None):
    """FFNN forward pass in one Pallas call.

    x:       [B, nin]
    xmean:   [1, nin] (or [nin])
    xstd:    [1, nin] (or [nin])
    weights: list of [in_i, out_i] arrays (hidden layers then output layer),
             i.e. transposed PyTorch nn.Linear weights.
    biases:  list of [out_i] / [1, out_i] arrays.
    param_dtype:  optionally cast weights (e.g. jnp.bfloat16 on v6e/v7x);
                  bias-add / activations remain f32 inside the kernel.
    return_padded: return the lane-dense [b_p, 128k] block instead of slicing
                  to [B, nout] (lets a consumer fuse/skip the slice copy).
    """
    n_layers = len(weights) - 1
    B, nin = x.shape
    nout = weights[-1].shape[1]
    dtype = x.dtype

    # ---- fold input normalization into layer 1 (tiny wrapper-time math):
    #   h = (x - xmean) * inv, inv = where(xstd==0, 1, 1/xstd)
    #   => z1 = h @ W1 + b1 = x @ (inv^T * W1) + (b1 - (xmean*inv) @ W1)
    xmean_r = jnp.reshape(xmean, (1, -1)).astype(jnp.float32)
    xstd_r = jnp.reshape(xstd, (1, -1)).astype(jnp.float32)
    inv = jnp.where(xstd_r == 0.0, 1.0, 1.0 / xstd_r)            # exact 1/std
    w1 = weights[0].astype(jnp.float32)
    b1 = jnp.reshape(biases[0], (1, -1)).astype(jnp.float32)
    w1_fold = w1 * jnp.reshape(inv, (-1, 1))
    b1_fold = b1 - (xmean_r * inv) @ w1

    folded_w = [w1_fold] + [w.astype(jnp.float32) for w in weights[1:]]
    folded_b = [b1_fold] + [jnp.reshape(b, (1, -1)).astype(jnp.float32)
                            for b in biases[1:]]

    target_w_dtype = param_dtype if param_dtype is not None else weights[0].dtype

    # ---- pad hidden/output feature dims to 128 lanes (zero padding is inert:
    #      padded weight rows are zero, so padded hidden columns never reach
    #      real outputs).  Layer-1's input dim stays at the true nin.
    params_flat = []
    for li, (w, b) in enumerate(zip(folded_w, folded_b)):
        wi, wo = w.shape
        wip = wi if li == 0 else _round_up(wi, LANE)
        wop = _round_up(wo, LANE)
        w_p = jnp.pad(w, ((0, wip - wi), (0, wop - wo))).astype(target_w_dtype)
        b_p = jnp.pad(b, ((0, 0), (0, wop - wo)))                 # stays f32
        params_flat += [w_p, b_p]

    nout_p = _round_up(nout, LANE)

    # ---- batch tiling (even grid for v7x, capped tiles, minimal padding).
    tb = _choose_batch_tile(B, block_batch, max_tile_rows)
    b_p = _round_up(B, tb)
    grid = (b_p // tb,)
    x_p = x if b_p == B else jnp.pad(x, ((0, b_p - B), (0, 0)))

    # ---- BlockSpecs: x / out tiled over batch; params VMEM-resident
    #      (constant block index across the grid -> DMA'd once).
    def resident_spec(arr):
        return pl.BlockSpec(arr.shape, lambda i: (0, 0))

    in_specs = [pl.BlockSpec((tb, nin), lambda i: (i, 0))]
    in_specs += [resident_spec(a) for a in params_flat]
    out_spec = pl.BlockSpec((tb, nout_p), lambda i: (i, 0))

    # ---- explicit VMEM limit (v5e's scoped default is 16 MiB); estimate the
    #      real footprint (lane-padded, double-buffered) and clamp <= 64 MiB
    #      so it is also valid on v7x's smaller physical VMEM.
    if vmem_limit_bytes is None:
        def buf_bytes(shape, dt):
            r, c = shape
            return (_round_up(r, SUBLANE) * _round_up(c, LANE)
                    * jnp.dtype(dt).itemsize)
        est = 2 * buf_bytes((tb, nin), dtype)            # x tile, 2 buffers
        est += 2 * buf_bytes((tb, nout_p), dtype)        # out tile, 2 buffers
        est += 2 * sum(buf_bytes(a.shape, a.dtype) for a in params_flat)
        vmem_limit_bytes = int(min(max(est + (8 << 20), 32 << 20), 64 << 20))

    out_padded = pl.pallas_call(
        _make_ffnn_kernel(n_layers, activation),
        grid=grid,
        in_specs=in_specs,
        out_specs=out_spec,
        out_shape=jax.ShapeDtypeStruct((b_p, nout_p), dtype),
        compiler_params=pltpu.CompilerParams(
            dimension_semantics=("parallel",),
            vmem_limit_bytes=vmem_limit_bytes),
    )(x_p, *params_flat)

    if return_padded:
        return out_padded
    return out_padded[:B, :nout]


# ----------------------------------------------------------------------------
# Pure-JAX reference (mirrors the PyTorch forward exactly)
# ----------------------------------------------------------------------------
def ffnn_ref(x, xmean, xstd, weights, biases, *, activation="tanh"):
    act = _activation_fn(activation)
    h = jnp.where(xstd == 0.0, x - xmean, (x - xmean) / xstd)
    for w, b in zip(weights[:-1], biases[:-1]):
        h = act(h @ w + jnp.reshape(b, (1, -1)))
    return h @ weights[-1] + jnp.reshape(biases[-1], (1, -1))


# ----------------------------------------------------------------------------
# Deterministic parameter construction (shapes from FFNN.__init__)
# ----------------------------------------------------------------------------
def build_params(key, nin, nout, n_layers, n_neurons, dtype=jnp.float32):
    widths = [nin] + [n_neurons] * n_layers      # exactly as in the module
    weights, biases = [], []
    dims = list(zip(widths[:-1], widths[1:])) + [(widths[-1], nout)]
    for fan_in, fan_out in dims:
        key, kw, kb = jax.random.split(key, 3)
        bound = 1.0 / jnp.sqrt(fan_in)           # nn.Linear default init scheme
        w_pt = jax.random.uniform(kw, (fan_out, fan_in), dtype, -bound, bound)
        b_pt = jax.random.uniform(kb, (fan_out,), dtype, -bound, bound)
        weights.append(jnp.asarray(w_pt).T)              # [in, out]
        biases.append(jnp.asarray(b_pt).reshape(1, -1))  # [1, out]
    return weights, biases


if __name__ == "__main__":
    key = jax.random.PRNGKey(0)

    # Small model (MPC surrogate scale) with a batch big enough to exercise
    # the tiled / parallel batch grid (default derivation -> tb=128, grid=2).
    batch = 256
    nin = 4
    nout = 3
    n_layers = 2
    n_neurons = 32
    activation = "tanh"
    dtype = jnp.float32

    # NNscale analogue: deterministic mean/std for input scaling.
    key, kx, km, ks = jax.random.split(key, 4)
    x = jax.random.normal(kx, (batch, nin), dtype)
    xmean = jax.random.normal(km, (1, nin), dtype)
    xstd = jnp.abs(jax.random.normal(ks, (1, nin), dtype)) + 0.5
    # Exercise the `xstd == 0` branch of the torch.where.
    xstd = xstd.at[0, 1].set(0.0)

    weights, biases = build_params(key, nin, nout, n_layers, n_neurons, dtype)

    y = ffnn_pallas(x, xmean, xstd, weights, biases, activation=activation)
    y = jax.block_until_ready(y)

    y_ref = ffnn_ref(x, xmean, xstd, weights, biases, activation=activation)
    assert y.shape == (batch, nout)
    assert jnp.allclose(y, y_ref, atol=1e-5, rtol=1e-5), "mismatch vs reference"

    print("KERNEL_OK")
</pallas_src>

<mosaic_0001>
module attributes {stable_mosaic.version = 11 : i64} {
  func.func @kernel(%arg0: i32, %arg1: memref<128x4xf32, #tpu.memory_space<vmem>>, %arg2: memref<4x128xf32, #tpu.memory_space<vmem>>, %arg3: memref<1x128xf32, #tpu.memory_space<vmem>>, %arg4: memref<128x128xf32, #tpu.memory_space<vmem>>, %arg5: memref<1x128xf32, #tpu.memory_space<vmem>>, %arg6: memref<128x128xf32, #tpu.memory_space<vmem>>, %arg7: memref<1x128xf32, #tpu.memory_space<vmem>>, %arg8: memref<128x128xf32, #tpu.memory_space<vmem>>) attributes {dimension_semantics = [#tpu.dimension_semantics<parallel>], iteration_bounds = array<i64: 2>, scalar_prefetch = 0 : i64, scratch_operands = 0 : i64, tpu.core_type = #tpu.core_type<tc>, window_params = [{transform_indices = @transform_0, window_bounds = array<i64: 128, 4>}, {pipeline_mode = #tpu.pipeline_mode<synchronous>, transform_indices = @transform_1, window_bounds = array<i64: 4, 128>}, {pipeline_mode = #tpu.pipeline_mode<synchronous>, transform_indices = @transform_2, window_bounds = array<i64: 1, 128>}, {pipeline_mode = #tpu.pipeline_mode<synchronous>, transform_indices = @transform_3, window_bounds = array<i64: 128, 128>}, {pipeline_mode = #tpu.pipeline_mode<synchronous>, transform_indices = @transform_4, window_bounds = array<i64: 1, 128>}, {pipeline_mode = #tpu.pipeline_mode<synchronous>, transform_indices = @transform_5, window_bounds = array<i64: 128, 128>}, {pipeline_mode = #tpu.pipeline_mode<synchronous>, transform_indices = @transform_6, window_bounds = array<i64: 1, 128>}, {transform_indices = @transform_7, window_bounds = array<i64: 128, 128>}]} {
    %c0 = arith.constant 0 : index
    %c0_0 = arith.constant 0 : index
    %0 = vector.load %arg1[%c0, %c0_0] : memref<128x4xf32, #tpu.memory_space<vmem>>, vector<128x4xf32>
    %c0_1 = arith.constant 0 : index
    %c0_2 = arith.constant 0 : index
    %1 = vector.load %arg2[%c0_1, %c0_2] : memref<4x128xf32, #tpu.memory_space<vmem>>, vector<4x128xf32>
    %c0_3 = arith.constant 0 : index
    %c0_4 = arith.constant 0 : index
    %2 = vector.load %arg3[%c0_3, %c0_4] : memref<1x128xf32, #tpu.memory_space<vmem>>, vector<1x128xf32>
    %cst = arith.constant dense<0.000000e+00> : vector<128x128xf32>
    %3 = tpu.matmul %0, %1, %cst {dimension_numbers = #tpu.dot_dimension_numbers<[1], [0], [0], [1], [0, 0, 1, 1], [], []>} : vector<128x4xf32>, vector<4x128xf32>, vector<128x128xf32> -> vector<128x128xf32>
    %4 = vector.broadcast %2 : vector<1x128xf32> to vector<128x128xf32>
    %5 = arith.addf %3, %4 : vector<128x128xf32>
    %6 = math.tanh %5 : vector<128x128xf32>
    %c0_5 = arith.constant 0 : index
    %c0_6 = arith.constant 0 : index
    %7 = vector.load %arg4[%c0_5, %c0_6] : memref<128x128xf32, #tpu.memory_space<vmem>>, vector<128x128xf32>
    %c0_7 = arith.constant 0 : index
    %c0_8 = arith.constant 0 : index
    %8 = vector.load %arg5[%c0_7, %c0_8] : memref<1x128xf32, #tpu.memory_space<vmem>>, vector<1x128xf32>
    %cst_9 = arith.constant dense<0.000000e+00> : vector<128x128xf32>
    %9 = tpu.matmul %6, %7, %cst_9 {dimension_numbers = #tpu.dot_dimension_numbers<[1], [0], [0], [1], [0, 0, 1, 1], [], []>} : vector<128x128xf32>, vector<128x128xf32>, vector<128x128xf32> -> vector<128x128xf32>
    %10 = vector.broadcast %8 : vector<1x128xf32> to vector<128x128xf32>
    %11 = arith.addf %9, %10 : vector<128x128xf32>
    %12 = math.tanh %11 : vector<128x128xf32>
    %c0_10 = arith.constant 0 : index
    %c0_11 = arith.constant 0 : index
    %13 = vector.load %arg6[%c0_10, %c0_11] : memref<128x128xf32, #tpu.memory_space<vmem>>, vector<128x128xf32>
    %c0_12 = arith.constant 0 : index
    %c0_13 = arith.constant 0 : index
    %14 = vector.load %arg7[%c0_12, %c0_13] : memref<1x128xf32, #tpu.memory_space<vmem>>, vector<1x128xf32>
    %cst_14 = arith.constant dense<0.000000e+00> : vector<128x128xf32>
    %15 = tpu.matmul %12, %13, %cst_14 {dimension_numbers = #tpu.dot_dimension_numbers<[1], [0], [0], [1], [0, 0, 1, 1], [], []>} : vector<128x128xf32>, vector<128x128xf32>, vector<128x128xf32> -> vector<128x128xf32>
    %16 = vector.broadcast %14 : vector<1x128xf32> to vector<128x128xf32>
    %17 = arith.addf %15, %16 : vector<128x128xf32>
    %c0_15 = arith.constant 0 : index
    %c0_16 = arith.constant 0 : index
    %18 = vector.load %arg8[%c0_15, %c0_16] : memref<128x128xf32, #tpu.memory_space<vmem>>, vector<128x128xf32>
    tpu.vector_store %arg8[%c0_15, %c0_16], %17 {strides = array<i32>} : memref<128x128xf32, #tpu.memory_space<vmem>>, vector<128x128xf32>,
    return
  }
  func.func @transform_0(%arg0: i32) -> (i32, i32) {
    %c0_i32 = arith.constant 0 : i32
    %c0_i32_0 = arith.constant 0 : i32
    return %arg0, %c0_i32 : i32, i32
  }
  func.func @transform_1(%arg0: i32) -> (i32, i32) {
    %c0_i32 = arith.constant 0 : i32
    %c0_i32_0 = arith.constant 0 : i32
    %c0_i32_1 = arith.constant 0 : i32
    return %c0_i32, %c0_i32_0 : i32, i32
  }
  func.func @transform_2(%arg0: i32) -> (i32, i32) {
    %c0_i32 = arith.constant 0 : i32
    %c0_i32_0 = arith.constant 0 : i32
    %c0_i32_1 = arith.constant 0 : i32
    return %c0_i32, %c0_i32_0 : i32, i32
  }
  func.func @transform_3(%arg0: i32) -> (i32, i32) {
    %c0_i32 = arith.constant 0 : i32
    %c0_i32_0 = arith.constant 0 : i32
    %c0_i32_1 = arith.constant 0 : i32
    return %c0_i32, %c0_i32_0 : i32, i32
  }
  func.func @transform_4(%arg0: i32) -> (i32, i32) {
    %c0_i32 = arith.constant 0 : i32
    %c0_i32_0 = arith.constant 0 : i32
    %c0_i32_1 = arith.constant 0 : i32
    return %c0_i32, %c0_i32_0 : i32, i32
  }
  func.func @transform_5(%arg0: i32) -> (i32, i32) {
    %c0_i32 = arith.constant 0 : i32
    %c0_i32_0 = arith.constant 0 : i32
    %c0_i32_1 = arith.constant 0 : i32
    return %c0_i32, %c0_i32_0 : i32, i32
  }
  func.func @transform_6(%arg0: i32) -> (i32, i32) {
    %c0_i32 = arith.constant 0 : i32
    %c0_i32_0 = arith.constant 0 : i32
    %c0_i32_1 = arith.constant 0 : i32
    return %c0_i32, %c0_i32_0 : i32, i32
  }
  func.func @transform_7(%arg0: i32) -> (i32, i32) {
    %c0_i32 = arith.constant 0 : i32
    %c0_i32_0 = arith.constant 0 : i32
    return %arg0, %c0_i32 : i32, i32
  }
}

</mosaic_0001>

<llo_original>
// kernel: tpu_custom_call.1
$region0: #{tpu_custom_call.1}
  #allocation0 [shape = 'u32[]', space=smem, size = 0x4, offset = 0x4, fixed_abs, tag = 'smem constant byte address 0x4 - core index']
  #allocation1 [shape = 'u32[144,128]{1,0:T(1,128)}', space=vmem, size = 0x12000, scoped, tag = 'internal scratch']
  %s0 = inlined_call_operand.vmem [shape: f32[256,4], index: 0, kind: input, shape index: {}]
  %s1 = inlined_call_operand.vmem [shape: f32[4,128], index: 1, kind: input, shape index: {}]
  %s2 = inlined_call_operand.vmem [shape: f32[1,128], index: 2, kind: input, shape index: {}]
  %s3 = inlined_call_operand.vmem [shape: f32[128,128], index: 3, kind: input, shape index: {}]
  %s4 = inlined_call_operand.vmem [shape: f32[1,128], index: 4, kind: input, shape index: {}]
  %s5 = inlined_call_operand.vmem [shape: f32[128,128], index: 5, kind: input, shape index: {}]
  %s6 = inlined_call_operand.vmem [shape: f32[1,128], index: 6, kind: input, shape index: {}]
  %s7 = inlined_call_operand.hbm [shape: f32[256,128], index: 7, kind: output, shape index: {}]
  %s8 = sld [smem:[#allocation0]]
  $region61: #{tpu_custom_call.1} parent=0
    _
  %s10 = ssub.s32 1, %s8
  %s11 = scalar_select 0, %s10, %s8
  $region1: #{tpu_custom_call.1} parent=0
    #allocation2 [shape = 'u8[131072]{0}', space=vmem, size = 0x20000, scoped, tag = 'output window, operand 0']
    #allocation3 [shape = 's32[2]{0}', space=sflag, size = 0x8, scoped, tag = 'scoped memory for tpu_custom_call.1']
    %12 = vsyncpa [#allocation3], 0
    %s13 = scalar_lea.sflag [#allocation3], 1
    %14 = vsyncpa %s13, 0
    loop: start=0, step=1, limit=4
    $region2: #{tpu_custom_call.1} parent=1 // loop_pre_header
      _
    $region3: #{tpu_custom_call.1} parent=1 // loop_header
      %s16 = sphi 0, %s20
      %p17 = scmp.ge.s32.totalorder %s16, 4
      %s26 = sphi 0, %s28
      %s29 = sphi 0, %s26
      %s30 = sphi 0, %s29
      %s46 = sphi 0, %s30
      %s50 = sphi 0, %s50
      %s52 = sphi 0, %s50
      %s53 = sphi 0, %s52
      %s67 = sphi 0, %s53
      %s71 = sphi 0, %s71
      %s73 = sphi 0, %s71
      %s74 = sphi 0, %s73
      %s88 = sphi 0, %s74
      %s92 = sphi 0, %s92
      %s94 = sphi 0, %s92
      %s95 = sphi 0, %s94
      %s109 = sphi 0, %s95
      %s113 = sphi 0, %s113
      %s115 = sphi 0, %s113
      %s116 = sphi 0, %s115
      %s130 = sphi 0, %s116
      %s134 = sphi 0, %s134
      %s136 = sphi 0, %s134
      %s137 = sphi 0, %s136
      %s151 = sphi 0, %s137
      %s155 = sphi 0, %s155
      %s157 = sphi 0, %s155
      %s158 = sphi 0, %s157
      %s172 = sphi 0, %s158
      %s178 = sphi 0, %s180
      %s181 = sphi 0, %s178
      %s182 = sphi 0, %s181
      %s198 = sphi 0, %s182
    $region4: #{tpu_custom_call.1} parent=1 // loop_header_branch
      %19 = sbr.rel (%p17) target = $region8
    $region5: #{tpu_custom_call.1} parent=1 // loop_body
      %s21 = ssub.s32 %s16, 1
      %s22 = ssub.s32 %s16, 2
      %s23 = sadd.s32 %s16, 1
      %s24 = ssub.s32 %s16, %s23
      %p25 = scmp.eq.s32.totalorder %s24, 0
      %s27 = sadd.s32 %s26, 1
      %s28 = scalar_select %p25, %s26, %s27
      %p31 = pneg %p25
      %p32 = scmp.eq.s32.totalorder %s16, 1
      %p33 = por %p31, %p32
      %p34 = scmp.ne.s32.totalorder %s26, %s29
      %p35 = scmp.eq.s32.totalorder %s16, 0
      %p36 = por %p34, %p35
      %p37 = scmp.ne.s32.totalorder %s26, %s29
      %p38 = scmp.eq.s32.totalorder %s21, 1
      %p39 = por %p37, %p38
      %p40 = scmp.ne.s32.totalorder %s29, %s30
      %p41 = scmp.eq.s32.totalorder %s21, 0
      %p42 = por %p40, %p41
      %p43 = scmp.ne.s32.totalorder %s29, %s30
      %p44 = scmp.eq.s32.totalorder %s22, 1
      %p45 = por %p43, %p44
      %p47 = scmp.ne.s32.totalorder %s30, %s46
      %p48 = scmp.eq.s32.totalorder %s22, 0
      %p49 = por %p47, %p48
      %s51 = sadd.s32 %s50, 1
      %p54 = scmp.eq.s32.totalorder %s16, 1
      %p55 = scmp.ne.s32.totalorder %s50, %s52
      %p56 = scmp.eq.s32.totalorder %s16, 0
      %p57 = por %p55, %p56
      %p58 = scmp.ne.s32.totalorder %s50, %s52
      %p59 = scmp.eq.s32.totalorder %s21, 1
      %p60 = por %p58, %p59
      %p61 = scmp.ne.s32.totalorder %s52, %s53
      %p62 = scmp.eq.s32.totalorder %s21, 0
      %p63 = por %p61, %p62
      %p64 = scmp.ne.s32.totalorder %s52, %s53
      %p65 = scmp.eq.s32.totalorder %s22, 1
      %p66 = por %p64, %p65
      %p68 = scmp.ne.s32.totalorder %s53, %s67
      %p69 = scmp.eq.s32.totalorder %s22, 0
      %p70 = por %p68, %p69
      %s72 = sadd.s32 %s71, 1
      %p75 = scmp.eq.s32.totalorder %s16, 1
      %p76 = scmp.ne.s32.totalorder %s71, %s73
      %p77 = scmp.eq.s32.totalorder %s16, 0
      %p78 = por %p76, %p77
      %p79 = scmp.ne.s32.totalorder %s71, %s73
      %p80 = scmp.eq.s32.totalorder %s21, 1
      %p81 = por %p79, %p80
      %p82 = scmp.ne.s32.totalorder %s73, %s74
      %p83 = scmp.eq.s32.totalorder %s21, 0
      %p84 = por %p82, %p83
      %p85 = scmp.ne.s32.totalorder %s73, %s74
      %p86 = scmp.eq.s32.totalorder %s22, 1
      %p87 = por %p85, %p86
      %p89 = scmp.ne.s32.totalorder %s74, %s88
      %p90 = scmp.eq.s32.totalorder %s22, 0
      %p91 = por %p89, %p90
      %s93 = sadd.s32 %s92, 1
      %p96 = scmp.eq.s32.totalorder %s16, 1
      %p97 = scmp.ne.s32.totalorder %s92, %s94
      %p98 = scmp.eq.s32.totalorder %s16, 0
      %p99 = por %p97, %p98
      %p100 = scmp.ne.s32.totalorder %s92, %s94
      %p101 = scmp.eq.s32.totalorder %s21, 1
      %p102 = por %p100, %p101
      %p103 = scmp.ne.s32.totalorder %s94, %s95
      %p104 = scmp.eq.s32.totalorder %s21, 0
      %p105 = por %p103, %p104
      %p106 = scmp.ne.s32.totalorder %s94, %s95
      %p107 = scmp.eq.s32.totalorder %s22, 1
      %p108 = por %p106, %p107
      %p110 = scmp.ne.s32.totalorder %s95, %s109
      %p111 = scmp.eq.s32.totalorder %s22, 0
      %p112 = por %p110, %p111
      %s114 = sadd.s32 %s113, 1
      %p117 = scmp.eq.s32.totalorder %s16, 1
      %p118 = scmp.ne.s32.totalorder %s113, %s115
      %p119 = scmp.eq.s32.totalorder %s16, 0
      %p120 = por %p118, %p119
      %p121 = scmp.ne.s32.totalorder %s113, %s115
      %p122 = scmp.eq.s32.totalorder %s21, 1
      %p123 = por %p121, %p122
      %p124 = scmp.ne.s32.totalorder %s115, %s116
      %p125 = scmp.eq.s32.totalorder %s21, 0
      %p126 = por %p124, %p125
      %p127 = scmp.ne.s32.totalorder %s115, %s116
      %p128 = scmp.eq.s32.totalorder %s22, 1
      %p129 = por %p127, %p128
      %p131 = scmp.ne.s32.totalorder %s116, %s130
      %p132 = scmp.eq.s32.totalorder %s22, 0
      %p133 = por %p131, %p132
      %s135 = sadd.s32 %s134, 1
      %p138 = scmp.eq.s32.totalorder %s16, 1
      %p139 = scmp.ne.s32.totalorder %s134, %s136
      %p140 = scmp.eq.s32.totalorder %s16, 0
      %p141 = por %p139, %p140
      %p142 = scmp.ne.s32.totalorder %s134, %s136
      %p143 = scmp.eq.s32.totalorder %s21, 1
      %p144 = por %p142, %p143
      %p145 = scmp.ne.s32.totalorder %s136, %s137
      %p146 = scmp.eq.s32.totalorder %s21, 0
      %p147 = por %p145, %p146
      %p148 = scmp.ne.s32.totalorder %s136, %s137
      %p149 = scmp.eq.s32.totalorder %s22, 1
      %p150 = por %p148, %p149
      %p152 = scmp.ne.s32.totalorder %s137, %s151
      %p153 = scmp.eq.s32.totalorder %s22, 0
      %p154 = por %p152, %p153
      %s156 = sadd.s32 %s155, 1
      %p159 = scmp.eq.s32.totalorder %s16, 1
      %p160 = scmp.ne.s32.totalorder %s155, %s157
      %p161 = scmp.eq.s32.totalorder %s16, 0
      %p162 = por %p160, %p161
      %p163 = scmp.ne.s32.totalorder %s155, %s157
      %p164 = scmp.eq.s32.totalorder %s21, 1
      %p165 = por %p163, %p164
      %p166 = scmp.ne.s32.totalorder %s157, %s158
      %p167 = scmp.eq.s32.totalorder %s21, 0
      %p168 = por %p166, %p167
      %p169 = scmp.ne.s32.totalorder %s157, %s158
      %p170 = scmp.eq.s32.totalorder %s22, 1
      %p171 = por %p169, %p170
      %p173 = scmp.ne.s32.totalorder %s158, %s172
      %p174 = scmp.eq.s32.totalorder %s22, 0
      %p175 = por %p173, %p174
      %s176 = ssub.s32 %s16, %s23
      %p177 = scmp.eq.s32.totalorder %s176, 0
      %s179 = sadd.s32 %s178, 1
      %s180 = scalar_select %p177, %s178, %s179
      %p183 = pneg %p177
      %p184 = scmp.eq.s32.totalorder %s16, 1
      %p185 = por %p183, %p184
      %p186 = scmp.ne.s32.totalorder %s178, %s181
      %p187 = scmp.eq.s32.totalorder %s16, 0
      %p188 = por %p186, %p187
      %p189 = scmp.ne.s32.totalorder %s178, %s181
      %p190 = scmp.eq.s32.totalorder %s21, 1
      %p191 = por %p189, %p190
      %p192 = scmp.ne.s32.totalorder %s181, %s182
      %p193 = scmp.eq.s32.totalorder %s21, 0
      %p194 = por %p192, %p193
      %p195 = scmp.ne.s32.totalorder %s181, %s182
      %p196 = scmp.eq.s32.totalorder %s22, 1
      %p197 = por %p195, %p196
      %p199 = scmp.ne.s32.totalorder %s182, %s198
      %p200 = scmp.eq.s32.totalorder %s22, 0
      %p201 = por %p199, %p200
      %p202 = scmp.le.s32.totalorder 1, %s16
      %p203 = scmp.lt.s32.totalorder %s16, 3
      %p204 = pnand %p202, %p203
      %p205 = pneg %p204
      // Predicated region
      $region9: #{tpu_custom_call.1} parent=5 // pred_check
        _
      $region10: #{tpu_custom_call.1} parent=5 // pred_check_branch
        %207 = sbr.rel (%p204) target = $region12
      $region11: #{tpu_custom_call.1} parent=5 // pred_region
        %s208 = ssub.s32 %s16, 1
        // Predicated region
        $region13: #{tpu_custom_call.1} parent=11 // pred_check
          %p209 = pneg %p63
        $region14: #{tpu_custom_call.1} parent=11 // pred_check_branch
          %211 = sbr.rel (%p209) target = $region16
        $region15: #{tpu_custom_call.1} parent=11 // pred_region
          _
        $region16: #{tpu_custom_call.1} parent=11 // pred_fallthru
          _
        // Predicated region
        $region17: #{tpu_custom_call.1} parent=11 // pred_check
          %p212 = pneg %p84
        $region18: #{tpu_custom_call.1} parent=11 // pred_check_branch
          %214 = sbr.rel (%p212) target = $region20
        $region19: #{tpu_custom_call.1} parent=11 // pred_region
          _
        $region20: #{tpu_custom_call.1} parent=11 // pred_fallthru
          _
        // Predicated region
        $region21: #{tpu_custom_call.1} parent=11 // pred_check
          %p215 = pneg %p105
        $region22: #{tpu_custom_call.1} parent=11 // pred_check_branch
          %217 = sbr.rel (%p215) target = $region24
        $region23: #{tpu_custom_call.1} parent=11 // pred_region
          _
        $region24: #{tpu_custom_call.1} parent=11 // pred_fallthru
          _
        // Predicated region
        $region25: #{tpu_custom_call.1} parent=11 // pred_check
          %p218 = pneg %p126
        $region26: #{tpu_custom_call.1} parent=11 // pred_check_branch
          %220 = sbr.rel (%p218) target = $region28
        $region27: #{tpu_custom_call.1} parent=11 // pred_region
          _
        $region28: #{tpu_custom_call.1} parent=11 // pred_fallthru
          _
        // Predicated region
        $region29: #{tpu_custom_call.1} parent=11 // pred_check
          %p221 = pneg %p147
        $region30: #{tpu_custom_call.1} parent=11 // pred_check_branch
          %223 = sbr.rel (%p221) target = $region32
        $region31: #{tpu_custom_call.1} parent=11 // pred_region
          _
        $region32: #{tpu_custom_call.1} parent=11 // pred_fallthru
          _
        // Predicated region
        $region33: #{tpu_custom_call.1} parent=11 // pred_check
          %p224 = pneg %p168
        $region34: #{tpu_custom_call.1} parent=11 // pred_check_branch
          %226 = sbr.rel (%p224) target = $region36
        $region35: #{tpu_custom_call.1} parent=11 // pred_region
          _
        $region36: #{tpu_custom_call.1} parent=11 // pred_fallthru
          _
      $region12: #{tpu_custom_call.1} parent=5 // pred_fallthru
        _
      %p227 = scmp.lt.s32.totalorder %s16, 2
      // Predicated region
      $region37: #{tpu_custom_call.1} parent=5 // pred_check
        %p228 = pneg %p227
      $region38: #{tpu_custom_call.1} parent=5 // pred_check_branch
        %230 = sbr.rel (%p228) target = $region40
      $region39: #{tpu_custom_call.1} parent=5 // pred_region
        // Predicated region
        $region41: #{tpu_custom_call.1} parent=39 // pred_check
          %p231 = pneg %p36
        $region42: #{tpu_custom_call.1} parent=39 // pred_check_branch
          %233 = sbr.rel (%p231) target = $region44
        $region43: #{tpu_custom_call.1} parent=39 // pred_region
          %s234 = smul.u32 16, %s16
          %p235 = scmp.lt.s32.totalorder %s234, 31
          %s236 = scalar_select %p235, %s234, 31
          %s237 = smul.addr %s236, 8
          %s238 = scalar_lea.vmem %s0, %s237
          %s239 = smul.u32 16, %s16
        $region44: #{tpu_custom_call.1} parent=39 // pred_fallthru
          _
      $region40: #{tpu_custom_call.1} parent=5 // pred_fallthru
        _
      %p240 = scmp.le.s32.totalorder 1, %s16
      %p241 = scmp.lt.s32.totalorder %s16, 3
      %p242 = pnand %p240, %p241
      %p243 = pneg %p242
      // Predicated region
      $region45: #{tpu_custom_call.1} parent=5 // pred_check
        _
      $region46: #{tpu_custom_call.1} parent=5 // pred_check_branch
        %245 = sbr.rel (%p242) target = $region48
      $region47: #{tpu_custom_call.1} parent=5 // pred_region
        %s246 = ssub.s32 %s16, 1
        %s247 = smul.u32 16, %s21
        %p248 = scmp.lt.s32.totalorder %s247, 31
        %s249 = scalar_select %p248, %s247, 31
        %s250 = smul.addr %s249, 8
        %s251 = scalar_lea.vmem %s0, %s250
        %p252 = pneg %p42
        %p253 = pneg %p39
        %p254 = pneg %p63
        %p255 = pneg %p60
        %p256 = pneg %p84
        %p257 = pneg %p81
        %p258 = pneg %p105
        %p259 = pneg %p102
        %p260 = pneg %p126
        %p261 = pneg %p123
        %p262 = pneg %p147
        %p263 = pneg %p144
        %p264 = pneg %p168
        %p265 = pneg %p165
        %p266 = pneg %p194
        %p267 = pneg %p191
        %s268 = sand.u32 %s181, 1
        %s269 = scalar_lea.sflag [#allocation3], %s268
        %s270 = sand.u32 %s181, 1
        %s271 = smul.addr %s270, 128
        %s272 = scalar_lea.vmem [#allocation2], %s271
        %s273 = smul.u32 16, %s21
        %p274 = scmp.lt.s32.totalorder %s273, 31
        %s275 = scalar_select %p274, %s273, 31
        %s276 = smul.addr %s275, 8
        %s277 = scalar_lea.vmem %s0, %s276
        %s278 = smul.u32 16, %s21
        %s279 = smul.u32 16, %s21
        %v280 = vld [vmem:[%s277] sm:$0xff]
        %v281 = vld [vmem:[%s277 + $0x8] sm:$0xff]
        %v282 = vld [vmem:[%s277 + $0x10] sm:$0xff]
        %v283 = vld [vmem:[%s277 + $0x18] sm:$0xff]
        %v284 = vld [vmem:[%s277 + $0x20] sm:$0xff]
        %v285 = vld [vmem:[%s277 + $0x28] sm:$0xff]
        %v286 = vld [vmem:[%s277 + $0x30] sm:$0xff]
        %v287 = vld [vmem:[%s277 + $0x38] sm:$0xff]
        %v288 = vld [vmem:[%s277 + $0x40] sm:$0xff]
        %v289 = vld [vmem:[%s277 + $0x48] sm:$0xff]
        %v290 = vld [vmem:[%s277 + $0x50] sm:$0xff]
        %v291 = vld [vmem:[%s277 + $0x58] sm:$0xff]
        %v292 = vld [vmem:[%s277 + $0x60] sm:$0xff]
        %v293 = vld [vmem:[%s277 + $0x68] sm:$0xff]
        %v294 = vld [vmem:[%s277 + $0x70] sm:$0xff]
        %v295 = vld [vmem:[%s277 + $0x78] sm:$0xff]
        %v296 = vld [vmem:[%s1] sm:$0xf]
        %v297 = vld [vmem:[%s2] sm:$0x1]
        %v299 = vlaneseq
        %v300 = vshrl.u32 %v299, 7
        %v301 = vsub.s32 0, %v300
        %v302 = vrot.slane %v297, %v301
        %vm304 = vcmask 31744
        %v306 = vsel %vm304, %v280, 0
        %v309 = vsel %vm304, %v281, 0
        %v312 = vsel %vm304, %v282, 0
        %v315 = vsel %vm304, %v283, 0
        %v318 = vsel %vm304, %v284, 0
        %v321 = vsel %vm304, %v285, 0
        %v324 = vsel %vm304, %v286, 0
        %v327 = vsel %vm304, %v287, 0
        %v330 = vsel %vm304, %v288, 0
        %v333 = vsel %vm304, %v289, 0
        %v336 = vsel %vm304, %v290, 0
        %v339 = vsel %vm304, %v291, 0
        %v342 = vsel %vm304, %v292, 0
        %v345 = vsel %vm304, %v293, 0
        %v348 = vsel %vm304, %v294, 0
        %v351 = vsel %vm304, %v295, 0
        %vm353 = vcmask 1043456
        %v355 = vsel %vm353, %v296, 0
        %357 = vmatprep.subr.mxu0 0.0
        %358 = vmatpush1.msra.mxu0 0.0
        %359 = vmatprep.subr.mxu0 0.0
        %360 = vmatpush1.msra.mxu0 0.0
        %361 = vmatprep.subr.mxu0 0.0
        %362 = vmatpush1.msra.mxu0 0.0
        %363 = vmatprep.subr.mxu0 0.0
        %364 = vmatpush1.msra.mxu0 0.0
        %365 = vmatprep.subr.mxu0 0.0
        %366 = vmatpush1.msra.mxu0 0.0
        %367 = vmatprep.subr.mxu0 0.0
        %368 = vmatpush1.msra.mxu0 0.0
        %369 = vmatprep.subr.mxu0 0.0
        %370 = vmatpush1.msra.mxu0 0.0
        %371 = vmatprep.subr.mxu0 0.0
        %372 = vmatpush1.msra.mxu0 0.0
        %373 = vmatprep.subr.mxu0 0.0
        %374 = vmatpush1.msra.mxu0 0.0
        %375 = vmatprep.subr.mxu0 0.0
        %376 = vmatpush1.msra.mxu0 0.0
        %377 = vmatprep.subr.mxu0 0.0
        %378 = vmatpush1.msra.mxu0 0.0
        %379 = vmatprep.subr.mxu0 0.0
        %380 = vmatpush1.msra.mxu0 0.0
        %381 = vmatprep.subr.mxu0 0.0
        %382 = vmatpush1.msra.mxu0 0.0
        %383 = vmatprep.subr.mxu0 0.0
        %384 = vmatpush1.msra.mxu0 0.0
        %385 = vmatprep.subr.mxu0 0.0
        %386 = vmatpush1.msra.mxu0 0.0
        %387 = vmatprep.subr.mxu0 0.0
        %388 = vmatpush1.msra.mxu0 %v355
        %389 = vmatprep.subr.mxu0 0.0
        %390 = vmatpush2.msra.mxu0 0.0
        %391 = vmatprep.subr.mxu0 0.0
        %392 = vmatpush2.msra.mxu0 0.0
        %393 = vmatprep.subr.mxu0 0.0
        %394 = vmatpush2.msra.mxu0 0.0
        %395 = vmatprep.subr.mxu0 0.0
        %396 = vmatpush2.msra.mxu0 0.0
        %397 = vmatprep.subr.mxu0 0.0
        %398 = vmatpush2.msra.mxu0 0.0
        %399 = vmatprep.subr.mxu0 0.0
        %400 = vmatpush2.msra.mxu0 0.0
        %401 = vmatprep.subr.mxu0 0.0
        %402 = vmatpush2.msra.mxu0 0.0
        %403 = vmatprep.subr.mxu0 0.0
        %404 = vmatpush2.msra.mxu0 0.0
        %405 = vmatprep.subr.mxu0 0.0
        %406 = vmatpush2.msra.mxu0 0.0
        %407 = vmatprep.subr.mxu0 0.0
        %408 = vmatpush2.msra.mxu0 0.0
        %409 = vmatprep.subr.mxu0 0.0
        %410 = vmatpush2.msra.mxu0 0.0
        %411 = vmatprep.subr.mxu0 0.0
        %412 = vmatpush2.msra.mxu0 0.0
        %413 = vmatprep.subr.mxu0 0.0
        %414 = vmatpush2.msra.mxu0 0.0
        %415 = vmatprep.subr.mxu0 0.0
        %416 = vmatpush2.msra.mxu0 0.0
        %417 = vmatprep.subr.mxu0 0.0
        %418 = vmatpush2.msra.mxu0 0.0
        %419 = vmatprep.subr.mxu0 0.0
        %420 = vmatpush2.msra.mxu0 0.0
        %421 = vmatprep.mubr.f32.mxu0 0.0
        %422 = vmatmul.mubr.f32.gmra.mxu0 %v306
        %v423 = vpop.f32.mrf.mxu0
        %v424 = vadd.f32 %v302, %v423
        %v425 = vpop.f32.mrf.mxu0
        %426 = vmatprep.mubr.f32.mxu0 0.0
        %427 = vmatmul.mubr.f32.gmra.mxu0 %v309
        %v428 = vpop.f32.mrf.mxu0
        %v429 = vadd.f32 %v302, %v428
        %v430 = vpop.f32.mrf.mxu0
        %431 = vmatprep.mubr.f32.mxu0 0.0
        %432 = vmatmul.mubr.f32.gmra.mxu0 %v312
        %v433 = vpop.f32.mrf.mxu0
        %v434 = vadd.f32 %v302, %v433
        %v435 = vpop.f32.mrf.mxu0
        %436 = vmatprep.mubr.f32.mxu0 0.0
        %437 = vmatmul.mubr.f32.gmra.mxu0 %v315
        %v438 = vpop.f32.mrf.mxu0
        %v439 = vadd.f32 %v302, %v438
        %v440 = vpop.f32.mrf.mxu0
        %441 = vmatprep.mubr.f32.mxu0 0.0
        %442 = vmatmul.mubr.f32.gmra.mxu0 %v318
        %v443 = vpop.f32.mrf.mxu0
        %v444 = vadd.f32 %v302, %v443
        %v445 = vpop.f32.mrf.mxu0
        %446 = vmatprep.mubr.f32.mxu0 0.0
        %447 = vmatmul.mubr.f32.gmra.mxu0 %v321
        %v448 = vpop.f32.mrf.mxu0
        %v449 = vadd.f32 %v302, %v448
        %v450 = vpop.f32.mrf.mxu0
        %451 = vmatprep.mubr.f32.mxu0 0.0
        %452 = vmatmul.mubr.f32.gmra.mxu0 %v324
        %v453 = vpop.f32.mrf.mxu0
        %v454 = vadd.f32 %v302, %v453
        %v455 = vpop.f32.mrf.mxu0
        %456 = vmatprep.mubr.f32.mxu0 0.0
        %457 = vmatmul.mubr.f32.gmra.mxu0 %v327
        %v458 = vpop.f32.mrf.mxu0
        %v459 = vadd.f32 %v302, %v458
        %v460 = vpop.f32.mrf.mxu0
        %461 = vmatprep.mubr.f32.mxu0 0.0
        %462 = vmatmul.mubr.f32.gmra.mxu0 %v330
        %v463 = vpop.f32.mrf.mxu0
        %v464 = vadd.f32 %v302, %v463
        %v465 = vpop.f32.mrf.mxu0
        %466 = vmatprep.mubr.f32.mxu0 0.0
        %467 = vmatmul.mubr.f32.gmra.mxu0 %v333
        %v468 = vpop.f32.mrf.mxu0
        %v469 = vadd.f32 %v302, %v468
        %v470 = vpop.f32.mrf.mxu0
        %471 = vmatprep.mubr.f32.mxu0 0.0
        %472 = vmatmul.mubr.f32.gmra.mxu0 %v336
        %v473 = vpop.f32.mrf.mxu0
        %v474 = vadd.f32 %v302, %v473
        %v475 = vpop.f32.mrf.mxu0
        %476 = vmatprep.mubr.f32.mxu0 0.0
        %477 = vmatmul.mubr.f32.gmra.mxu0 %v339
        %v478 = vpop.f32.mrf.mxu0
        %v479 = vadd.f32 %v302, %v478
        %v480 = vpop.f32.mrf.mxu0
        %481 = vmatprep.mubr.f32.mxu0 0.0
        %482 = vmatmul.mubr.f32.gmra.mxu0 %v342
        %v483 = vpop.f32.mrf.mxu0
        %v484 = vadd.f32 %v302, %v483
        %v485 = vpop.f32.mrf.mxu0
        %486 = vmatprep.mubr.f32.mxu0 0.0
        %487 = vmatmul.mubr.f32.gmra.mxu0 %v345
        %v488 = vpop.f32.mrf.mxu0
        %v489 = vadd.f32 %v302, %v488
        %v490 = vpop.f32.mrf.mxu0
        %491 = vmatprep.mubr.f32.mxu0 0.0
        %492 = vmatmul.mubr.f32.gmra.mxu0 %v348
        %v493 = vpop.f32.mrf.mxu0
        %v494 = vadd.f32 %v302, %v493
        %v495 = vpop.f32.mrf.mxu0
        %496 = vmatprep.mubr.f32.mxu0 0.0
        %497 = vmatmul.mubr.f32.gmra.mxu0 %v351
        %v498 = vpop.f32.mrf.mxu0
        %v499 = vadd.f32 %v302, %v498
        %v500 = vpop.f32.mrf.mxu0
        %501 = vdwg.mxu0
        %v502 = vtanh.pop %v424
        %v503 = vtanh.pop %v429
        %v504 = vtanh.pop %v434
        %v505 = vtanh.pop %v439
        %v506 = vtanh.pop %v444
        %v507 = vtanh.pop %v449
        %v508 = vtanh.pop %v454
        %v509 = vtanh.pop %v459
        %v510 = vtanh.pop %v464
        %v511 = vtanh.pop %v469
        %v512 = vtanh.pop %v474
        %v513 = vtanh.pop %v479
        %v514 = vtanh.pop %v484
        %v515 = vtanh.pop %v489
        %v516 = vtanh.pop %v494
        %v517 = vtanh.pop %v499
        %v518 = vld [vmem:[%s3] sm:$0xff]
        %v519 = vld [vmem:[%s3 + $0x8] sm:$0xff]
        %v520 = vld [vmem:[%s3 + $0x10] sm:$0xff]
        %v521 = vld [vmem:[%s3 + $0x18] sm:$0xff]
        %v522 = vld [vmem:[%s3 + $0x20] sm:$0xff]
        %v523 = vld [vmem:[%s3 + $0x28] sm:$0xff]
        %v524 = vld [vmem:[%s3 + $0x30] sm:$0xff]
        %v525 = vld [vmem:[%s3 + $0x38] sm:$0xff]
        %v526 = vld [vmem:[%s3 + $0x40] sm:$0xff]
        %v527 = vld [vmem:[%s3 + $0x48] sm:$0xff]
        %v528 = vld [vmem:[%s3 + $0x50] sm:$0xff]
        %v529 = vld [vmem:[%s3 + $0x58] sm:$0xff]
        %v530 = vld [vmem:[%s3 + $0x60] sm:$0xff]
        %v531 = vld [vmem:[%s3 + $0x68] sm:$0xff]
        %v532 = vld [vmem:[%s3 + $0x70] sm:$0xff]
        %v533 = vld [vmem:[%s3 + $0x78] sm:$0xff]
        %v534 = vld [vmem:[%s4] sm:$0x1]
        %v536 = vlaneseq
        %v537 = vshrl.u32 %v536, 7
        %v538 = vsub.s32 0, %v537
        %v539 = vrot.slane %v534, %v538
        %541 = vmatprep.subr.mxu0 0.0
        %542 = vmatpush1.msra.mxu0 %v533
        %543 = vmatprep.subr.mxu0 0.0
        %544 = vmatpush1.msra.mxu0 %v532
        %545 = vmatprep.subr.mxu0 0.0
        %546 = vmatpush1.msra.mxu0 %v531
        %547 = vmatprep.subr.mxu0 0.0
        %548 = vmatpush1.msra.mxu0 %v530
        %549 = vmatprep.subr.mxu0 0.0
        %550 = vmatpush1.msra.mxu0 %v529
        %551 = vmatprep.subr.mxu0 0.0
        %552 = vmatpush1.msra.mxu0 %v528
        %553 = vmatprep.subr.mxu0 0.0
        %554 = vmatpush1.msra.mxu0 %v527
        %555 = vmatprep.subr.mxu0 0.0
        %556 = vmatpush1.msra.mxu0 %v526
        %557 = vmatprep.subr.mxu0 0.0
        %558 = vmatpush1.msra.mxu0 %v525
        %559 = vmatprep.subr.mxu0 0.0
        %560 = vmatpush1.msra.mxu0 %v524
        %561 = vmatprep.subr.mxu0 0.0
        %562 = vmatpush1.msra.mxu0 %v523
        %563 = vmatprep.subr.mxu0 0.0
        %564 = vmatpush1.msra.mxu0 %v522
        %565 = vmatprep.subr.mxu0 0.0
        %566 = vmatpush1.msra.mxu0 %v521
        %567 = vmatprep.subr.mxu0 0.0
        %568 = vmatpush1.msra.mxu0 %v520
        %569 = vmatprep.subr.mxu0 0.0
        %570 = vmatpush1.msra.mxu0 %v519
        %571 = vmatprep.subr.mxu0 0.0
        %572 = vmatpush1.msra.mxu0 %v518
        %573 = vmatprep.subr.mxu0 0.0
        %574 = vmatpush2.msra.mxu0 0.0
        %575 = vmatprep.subr.mxu0 0.0
        %576 = vmatpush2.msra.mxu0 0.0
        %577 = vmatprep.subr.mxu0 0.0
        %578 = vmatpush2.msra.mxu0 0.0
        %579 = vmatprep.subr.mxu0 0.0
        %580 = vmatpush2.msra.mxu0 0.0
        %581 = vmatprep.subr.mxu0 0.0
        %582 = vmatpush2.msra.mxu0 0.0
        %583 = vmatprep.subr.mxu0 0.0
        %584 = vmatpush2.msra.mxu0 0.0
        %585 = vmatprep.subr.mxu0 0.0
        %586 = vmatpush2.msra.mxu0 0.0
        %587 = vmatprep.subr.mxu0 0.0
        %588 = vmatpush2.msra.mxu0 0.0
        %589 = vmatprep.subr.mxu0 0.0
        %590 = vmatpush2.msra.mxu0 0.0
        %591 = vmatprep.subr.mxu0 0.0
        %592 = vmatpush2.msra.mxu0 0.0
        %593 = vmatprep.subr.mxu0 0.0
        %594 = vmatpush2.msra.mxu0 0.0
        %595 = vmatprep.subr.mxu0 0.0
        %596 = vmatpush2.msra.mxu0 0.0
        %597 = vmatprep.subr.mxu0 0.0
        %598 = vmatpush2.msra.mxu0 0.0
        %599 = vmatprep.subr.mxu0 0.0
        %600 = vmatpush2.msra.mxu0 0.0
        %601 = vmatprep.subr.mxu0 0.0
        %602 = vmatpush2.msra.mxu0 0.0
        %603 = vmatprep.subr.mxu0 0.0
        %604 = vmatpush2.msra.mxu0 0.0
        %605 = vmatprep.mubr.f32.mxu0 0.0
        %606 = vmatmul.mubr.f32.gmra.mxu0 %v502
        %v607 = vpop.f32.mrf.mxu0
        %v608 = vadd.f32 %v539, %v607
        %v609 = vpop.f32.mrf.mxu0
        %610 = vmatprep.mubr.f32.mxu0 0.0
        %611 = vmatmul.mubr.f32.gmra.mxu0 %v503
        %v612 = vpop.f32.mrf.mxu0
        %v613 = vadd.f32 %v539, %v612
        %v614 = vpop.f32.mrf.mxu0
        %615 = vmatprep.mubr.f32.mxu0 0.0
        %616 = vmatmul.mubr.f32.gmra.mxu0 %v504
        %v617 = vpop.f32.mrf.mxu0
        %v618 = vadd.f32 %v539, %v617
        %v619 = vpop.f32.mrf.mxu0
        %620 = vmatprep.mubr.f32.mxu0 0.0
        %621 = vmatmul.mubr.f32.gmra.mxu0 %v505
        %v622 = vpop.f32.mrf.mxu0
        %v623 = vadd.f32 %v539, %v622
        %v624 = vpop.f32.mrf.mxu0
        %625 = vmatprep.mubr.f32.mxu0 0.0
        %626 = vmatmul.mubr.f32.gmra.mxu0 %v506
        %v627 = vpop.f32.mrf.mxu0
        %v628 = vadd.f32 %v539, %v627
        %v629 = vpop.f32.mrf.mxu0
        %630 = vmatprep.mubr.f32.mxu0 0.0
        %631 = vmatmul.mubr.f32.gmra.mxu0 %v507
        %v632 = vpop.f32.mrf.mxu0
        %v633 = vadd.f32 %v539, %v632
        %v634 = vpop.f32.mrf.mxu0
        %635 = vmatprep.mubr.f32.mxu0 0.0
        %636 = vmatmul.mubr.f32.gmra.mxu0 %v508
        %v637 = vpop.f32.mrf.mxu0
        %v638 = vadd.f32 %v539, %v637
        %v639 = vpop.f32.mrf.mxu0
        %640 = vmatprep.mubr.f32.mxu0 0.0
        %641 = vmatmul.mubr.f32.gmra.mxu0 %v509
        %v642 = vpop.f32.mrf.mxu0
        %v643 = vadd.f32 %v539, %v642
        %v644 = vpop.f32.mrf.mxu0
        %645 = vmatprep.mubr.f32.mxu0 0.0
        %646 = vmatmul.mubr.f32.gmra.mxu0 %v510
        %v647 = vpop.f32.mrf.mxu0
        %v648 = vadd.f32 %v539, %v647
        %v649 = vpop.f32.mrf.mxu0
        %650 = vmatprep.mubr.f32.mxu0 0.0
        %651 = vmatmul.mubr.f32.gmra.mxu0 %v511
        %v652 = vpop.f32.mrf.mxu0
        %v653 = vadd.f32 %v539, %v652
        %v654 = vpop.f32.mrf.mxu0
        %655 = vmatprep.mubr.f32.mxu0 0.0
        %656 = vmatmul.mubr.f32.gmra.mxu0 %v512
        %v657 = vpop.f32.mrf.mxu0
        %v658 = vadd.f32 %v539, %v657
        %v659 = vpop.f32.mrf.mxu0
        %660 = vmatprep.mubr.f32.mxu0 0.0
        %661 = vmatmul.mubr.f32.gmra.mxu0 %v513
        %v662 = vpop.f32.mrf.mxu0
        %v663 = vadd.f32 %v539, %v662
        %v664 = vpop.f32.mrf.mxu0
        %665 = vmatprep.mubr.f32.mxu0 0.0
        %666 = vmatmul.mubr.f32.gmra.mxu0 %v514
        %v667 = vpop.f32.mrf.mxu0
        %v668 = vadd.f32 %v539, %v667
        %v669 = vpop.f32.mrf.mxu0
        %670 = vmatprep.mubr.f32.mxu0 0.0
        %671 = vmatmul.mubr.f32.gmra.mxu0 %v515
        %v672 = vpop.f32.mrf.mxu0
        %v673 = vadd.f32 %v539, %v672
        %v674 = vpop.f32.mrf.mxu0
        %675 = vmatprep.mubr.f32.mxu0 0.0
        %676 = vmatmul.mubr.f32.gmra.mxu0 %v516
        %v677 = vpop.f32.mrf.mxu0
        %v678 = vadd.f32 %v539, %v677
        %v679 = vpop.f32.mrf.mxu0
        %680 = vmatprep.mubr.f32.mxu0 0.0
        %681 = vmatmul.mubr.f32.gmra.mxu0 %v517
        %v682 = vpop.f32.mrf.mxu0
        %v683 = vadd.f32 %v539, %v682
        %v684 = vpop.f32.mrf.mxu0
        %685 = vdwg.mxu0
        %v686 = vtanh.pop %v608
        %v687 = vtanh.pop %v613
        %v688 = vtanh.pop %v618
        %v689 = vtanh.pop %v623
        %v690 = vtanh.pop %v628
        %v691 = vtanh.pop %v633
        %v692 = vtanh.pop %v638
        %v693 = vtanh.pop %v643
        %v694 = vtanh.pop %v648
        %v695 = vtanh.pop %v653
        %v696 = vtanh.pop %v658
        %v697 = vtanh.pop %v663
        %v698 = vtanh.pop %v668
        %v699 = vtanh.pop %v673
        %v700 = vtanh.pop %v678
        %v701 = vtanh.pop %v683
        %v702 = vld [vmem:[%s5] sm:$0xff]
        %v703 = vld [vmem:[%s5 + $0x8] sm:$0xff]
        %v704 = vld [vmem:[%s5 + $0x10] sm:$0xff]
        %v705 = vld [vmem:[%s5 + $0x18] sm:$0xff]
        %v706 = vld [vmem:[%s5 + $0x20] sm:$0xff]
        %v707 = vld [vmem:[%s5 + $0x28] sm:$0xff]
        %v708 = vld [vmem:[%s5 + $0x30] sm:$0xff]
        %v709 = vld [vmem:[%s5 + $0x38] sm:$0xff]
        %v710 = vld [vmem:[%s5 + $0x40] sm:$0xff]
        %v711 = vld [vmem:[%s5 + $0x48] sm:$0xff]
        %v712 = vld [vmem:[%s5 + $0x50] sm:$0xff]
        %v713 = vld [vmem:[%s5 + $0x58] sm:$0xff]
        %v714 = vld [vmem:[%s5 + $0x60] sm:$0xff]
        %v715 = vld [vmem:[%s5 + $0x68] sm:$0xff]
        %v716 = vld [vmem:[%s5 + $0x70] sm:$0xff]
        %v717 = vld [vmem:[%s5 + $0x78] sm:$0xff]
        %v718 = vld [vmem:[%s6] sm:$0x1]
        %v720 = vlaneseq
        %v721 = vshrl.u32 %v720, 7
        %v722 = vsub.s32 0, %v721
        %v723 = vrot.slane %v718, %v722
        %725 = vmatprep.subr.mxu0 0.0
        %726 = vmatpush1.msra.mxu0 %v717
        %727 = vmatprep.subr.mxu0 0.0
        %728 = vmatpush1.msra.mxu0 %v716
        %729 = vmatprep.subr.mxu0 0.0
        %730 = vmatpush1.msra.mxu0 %v715
        %731 = vmatprep.subr.mxu0 0.0
        %732 = vmatpush1.msra.mxu0 %v714
        %733 = vmatprep.subr.mxu0 0.0
        %734 = vmatpush1.msra.mxu0 %v713
        %735 = vmatprep.subr.mxu0 0.0
        %736 = vmatpush1.msra.mxu0 %v712
        %737 = vmatprep.subr.mxu0 0.0
        %738 = vmatpush1.msra.mxu0 %v711
        %739 = vmatprep.subr.mxu0 0.0
        %740 = vmatpush1.msra.mxu0 %v710
        %741 = vmatprep.subr.mxu0 0.0
        %742 = vmatpush1.msra.mxu0 %v709
        %743 = vmatprep.subr.mxu0 0.0
        %744 = vmatpush1.msra.mxu0 %v708
        %745 = vmatprep.subr.mxu0 0.0
        %746 = vmatpush1.msra.mxu0 %v707
        %747 = vmatprep.subr.mxu0 0.0
        %748 = vmatpush1.msra.mxu0 %v706
        %749 = vmatprep.subr.mxu0 0.0
        %750 = vmatpush1.msra.mxu0 %v705
        %751 = vmatprep.subr.mxu0 0.0
        %752 = vmatpush1.msra.mxu0 %v704
        %753 = vmatprep.subr.mxu0 0.0
        %754 = vmatpush1.msra.mxu0 %v703
        %755 = vmatprep.subr.mxu0 0.0
        %756 = vmatpush1.msra.mxu0 %v702
        %757 = vmatprep.subr.mxu0 0.0
        %758 = vmatpush2.msra.mxu0 0.0
        %759 = vmatprep.subr.mxu0 0.0
        %760 = vmatpush2.msra.mxu0 0.0
        %761 = vmatprep.subr.mxu0 0.0
        %762 = vmatpush2.msra.mxu0 0.0
        %763 = vmatprep.subr.mxu0 0.0
        %764 = vmatpush2.msra.mxu0 0.0
        %765 = vmatprep.subr.mxu0 0.0
        %766 = vmatpush2.msra.mxu0 0.0
        %767 = vmatprep.subr.mxu0 0.0
        %768 = vmatpush2.msra.mxu0 0.0
        %769 = vmatprep.subr.mxu0 0.0
        %770 = vmatpush2.msra.mxu0 0.0
        %771 = vmatprep.subr.mxu0 0.0
        %772 = vmatpush2.msra.mxu0 0.0
        %773 = vmatprep.subr.mxu0 0.0
        %774 = vmatpush2.msra.mxu0 0.0
        %775 = vmatprep.subr.mxu0 0.0
        %776 = vmatpush2.msra.mxu0 0.0
        %777 = vmatprep.subr.mxu0 0.0
        %778 = vmatpush2.msra.mxu0 0.0
        %779 = vmatprep.subr.mxu0 0.0
        %780 = vmatpush2.msra.mxu0 0.0
        %781 = vmatprep.subr.mxu0 0.0
        %782 = vmatpush2.msra.mxu0 0.0
        %783 = vmatprep.subr.mxu0 0.0
        %784 = vmatpush2.msra.mxu0 0.0
        %785 = vmatprep.subr.mxu0 0.0
        %786 = vmatpush2.msra.mxu0 0.0
        %787 = vmatprep.subr.mxu0 0.0
        %788 = vmatpush2.msra.mxu0 0.0
        %789 = vmatprep.mubr.f32.mxu0 0.0
        %790 = vmatmul.mubr.f32.gmra.mxu0 %v686
        %v791 = vpop.f32.mrf.mxu0
        %v792 = vadd.f32 %v723, %v791
        %v793 = vpop.f32.mrf.mxu0
        %794 = vmatprep.mubr.f32.mxu0 0.0
        %795 = vmatmul.mubr.f32.gmra.mxu0 %v687
        %v796 = vpop.f32.mrf.mxu0
        %v797 = vadd.f32 %v723, %v796
        %v798 = vpop.f32.mrf.mxu0
        %799 = vmatprep.mubr.f32.mxu0 0.0
        %800 = vmatmul.mubr.f32.gmra.mxu0 %v688
        %v801 = vpop.f32.mrf.mxu0
        %v802 = vadd.f32 %v723, %v801
        %v803 = vpop.f32.mrf.mxu0
        %804 = vmatprep.mubr.f32.mxu0 0.0
        %805 = vmatmul.mubr.f32.gmra.mxu0 %v689
        %v806 = vpop.f32.mrf.mxu0
        %v807 = vadd.f32 %v723, %v806
        %v808 = vpop.f32.mrf.mxu0
        %809 = vmatprep.mubr.f32.mxu0 0.0
        %810 = vmatmul.mubr.f32.gmra.mxu0 %v690
        %v811 = vpop.f32.mrf.mxu0
        %v812 = vadd.f32 %v723, %v811
        %v813 = vpop.f32.mrf.mxu0
        %814 = vmatprep.mubr.f32.mxu0 0.0
        %815 = vmatmul.mubr.f32.gmra.mxu0 %v691
        %v816 = vpop.f32.mrf.mxu0
        %v817 = vadd.f32 %v723, %v816
        %v818 = vpop.f32.mrf.mxu0
        %819 = vmatprep.mubr.f32.mxu0 0.0
        %820 = vmatmul.mubr.f32.gmra.mxu0 %v692
        %v821 = vpop.f32.mrf.mxu0
        %v822 = vadd.f32 %v723, %v821
        %v823 = vpop.f32.mrf.mxu0
        %824 = vmatprep.mubr.f32.mxu0 0.0
        %825 = vmatmul.mubr.f32.gmra.mxu0 %v693
        %v826 = vpop.f32.mrf.mxu0
        %v827 = vadd.f32 %v723, %v826
        %v828 = vpop.f32.mrf.mxu0
        %829 = vmatprep.mubr.f32.mxu0 0.0
        %830 = vmatmul.mubr.f32.gmra.mxu0 %v694
        %v831 = vpop.f32.mrf.mxu0
        %v832 = vadd.f32 %v723, %v831
        %v833 = vpop.f32.mrf.mxu0
        %834 = vmatprep.mubr.f32.mxu0 0.0
        %835 = vmatmul.mubr.f32.gmra.mxu0 %v695
        %v836 = vpop.f32.mrf.mxu0
        %v837 = vadd.f32 %v723, %v836
        %v838 = vpop.f32.mrf.mxu0
        %839 = vmatprep.mubr.f32.mxu0 0.0
        %840 = vmatmul.mubr.f32.gmra.mxu0 %v696
        %v841 = vpop.f32.mrf.mxu0
        %v842 = vadd.f32 %v723, %v841
        %v843 = vpop.f32.mrf.mxu0
        %844 = vmatprep.mubr.f32.mxu0 0.0
        %845 = vmatmul.mubr.f32.gmra.mxu0 %v697
        %v846 = vpop.f32.mrf.mxu0
        %v847 = vadd.f32 %v723, %v846
        %v848 = vpop.f32.mrf.mxu0
        %849 = vmatprep.mubr.f32.mxu0 0.0
        %850 = vmatmul.mubr.f32.gmra.mxu0 %v698
        %v851 = vpop.f32.mrf.mxu0
        %v852 = vadd.f32 %v723, %v851
        %v853 = vpop.f32.mrf.mxu0
        %854 = vmatprep.mubr.f32.mxu0 0.0
        %855 = vmatmul.mubr.f32.gmra.mxu0 %v699
        %v856 = vpop.f32.mrf.mxu0
        %v857 = vadd.f32 %v723, %v856
        %v858 = vpop.f32.mrf.mxu0
        %859 = vmatprep.mubr.f32.mxu0 0.0
        %860 = vmatmul.mubr.f32.gmra.mxu0 %v700
        %v861 = vpop.f32.mrf.mxu0
        %v862 = vadd.f32 %v723, %v861
        %v863 = vpop.f32.mrf.mxu0
        %864 = vmatprep.mubr.f32.mxu0 0.0
        %865 = vmatmul.mubr.f32.gmra.mxu0 %v701
        %v866 = vpop.f32.mrf.mxu0
        %v867 = vadd.f32 %v723, %v866
        %v868 = vpop.f32.mrf.mxu0
        %869 = vdwg.mxu0
        %870 = vst [vmem:[%s272] sm:$0xff] %v792
        %871 = vst [vmem:[%s272 + $0x8] sm:$0xff] %v797
        %872 = vst [vmem:[%s272 + $0x10] sm:$0xff] %v802
        %873 = vst [vmem:[%s272 + $0x18] sm:$0xff] %v807
        %874 = vst [vmem:[%s272 + $0x20] sm:$0xff] %v812
        %875 = vst [vmem:[%s272 + $0x28] sm:$0xff] %v817
        %876 = vst [vmem:[%s272 + $0x30] sm:$0xff] %v822
        %877 = vst [vmem:[%s272 + $0x38] sm:$0xff] %v827
        %878 = vst [vmem:[%s272 + $0x40] sm:$0xff] %v832
        %879 = vst [vmem:[%s272 + $0x48] sm:$0xff] %v837
        %880 = vst [vmem:[%s272 + $0x50] sm:$0xff] %v842
        %881 = vst [vmem:[%s272 + $0x58] sm:$0xff] %v847
        %882 = vst [vmem:[%s272 + $0x60] sm:$0xff] %v852
        %883 = vst [vmem:[%s272 + $0x68] sm:$0xff] %v857
        %884 = vst [vmem:[%s272 + $0x70] sm:$0xff] %v862
        %885 = vst [vmem:[%s272 + $0x78] sm:$0xff] %v867
        %s886 = sand.u32 %s181, 1
        %s887 = scalar_lea.sflag [#allocation3], %s886
        %s888 = sand.u32 %s181, 1
        %s889 = smul.addr %s888, 128
        %s890 = scalar_lea.vmem [#allocation2], %s889
        // Predicated region
        $region49: #{tpu_custom_call.1} parent=47 // pred_check
          %p891 = pneg %p191
        $region50: #{tpu_custom_call.1} parent=47 // pred_check_branch
          %893 = sbr.rel (%p891) target = $region52
        $region51: #{tpu_custom_call.1} parent=47 // pred_region
          %s894 = smul.u32 16, %s21
          %s896 = ssub.s32 2048, 2048
          %897 = vsyncadd %s887, %s896
          %s898 = smul.addr %s894, 128
          %s899 = scalar_lea.hbm %s7, %s898
          %s900 = sshll.u32 %s890, 4
          %s901 = int_to_ptr.vmem [resolvable:$true] %s900
          %906 = dma.vmem_to_hbm [thread:$0]  %s901, 2048, %s899, %s887, 128, 128, 8
        $region52: #{tpu_custom_call.1} parent=47 // pred_fallthru
          _
      $region48: #{tpu_custom_call.1} parent=5 // pred_fallthru
        _
      %p907 = scmp.le.s32.totalorder 2, %s16
      // Predicated region
      $region53: #{tpu_custom_call.1} parent=5 // pred_check
        %p908 = pneg %p907
      $region54: #{tpu_custom_call.1} parent=5 // pred_check_branch
        %910 = sbr.rel (%p908) target = $region56
      $region55: #{tpu_custom_call.1} parent=5 // pred_region
        %s911 = ssub.s32 %s16, 2
        // Predicated region
        $region57: #{tpu_custom_call.1} parent=55 // pred_check
          %p912 = pneg %p197
        $region58: #{tpu_custom_call.1} parent=55 // pred_check_branch
          %914 = sbr.rel (%p912) target = $region60
        $region59: #{tpu_custom_call.1} parent=55 // pred_region
          %s915 = sand.u32 %s182, 1
          %s916 = scalar_lea.sflag [#allocation3], %s915
          %s917 = sand.u32 %s182, 1
          %s918 = smul.addr %s917, 128
          %s919 = scalar_lea.vmem [#allocation2], %s918
          %920 = dma.done %s916, 2048
        $region60: #{tpu_custom_call.1} parent=55 // pred_fallthru
          _
      $region56: #{tpu_custom_call.1} parent=5 // pred_fallthru
        _
    $region6: #{tpu_custom_call.1} parent=1 // loop_footer
      %s20 = sadd.s32 1, %s16
    $region7: #{tpu_custom_call.1} parent=1 // loop_footer_branch
      %15 = sbr.rel target = $region3
    $region8: #{tpu_custom_call.1} parent=1 // loop_exit
      _
    %921 = vsyncpa [#allocation3], 1
    %s922 = scalar_lea.sflag [#allocation3], 1
    %923 = vsyncpa %s922, 1

</llo_original>
